<compile_context>
chip_gen: v5e
topology: v5e:2x2
jax: 0.10.0
libtpu: 0.0.40
codegen_flags: <defaults>
</compile_context>

<pallas_src>
import functools

import numpy as np
import jax
import jax.numpy as jnp
from jax.experimental import pallas as pl
from jax.experimental.pallas import tpu as pltpu


# VMEM sizing: _VMEM_LIMIT_BYTES is the scoped-VMEM ceiling requested from
# Mosaic (64 MiB is <= physical VMEM on v5e/v6e (128 MiB) and v7x (64 MiB));
# _VMEM_BUDGET_BYTES is the target for the per-grid-step working set, leaving
# headroom for compiler-internal scratch and relayout buffers.
_VMEM_LIMIT_BYTES = 64 * 1024 * 1024
_VMEM_BUDGET_BYTES = 40 * 1024 * 1024
_MIN_GRID_STEPS = 4     # keep >= 4 pipeline steps (also feeds both v7x cores)
_MAX_BATCH_TILE = 8     # bound the statically unrolled per-batch loop


def fnet_kernel(x_ref, cn_ref, sn_ref, cms_ref, cd_ref, nsd_ref,
                re_ref, im_ref):
    """One grid step processes TB batch elements.

    Per batch slice (N, D):
      Stage 1 (fft along dim=-1):  R = x @ C_D,  I = x @ (-S_D)
      Stage 2 (fft along dim=-2), Karatsuba complex product streamed straight
      into the output refs so at most one f32 product is live at a time:
        re  = C_N @ R          ; im  = -(C_N @ R)
        re += S_N @ I          ; im +=  S_N @ I
                                 im += (C_N - S_N) @ (R + I)
    """
    tb = x_ref.shape[0]            # static Python int (<= _MAX_BATCH_TILE)
    for b in range(tb):
        xb = x_ref[b]              # (N, D) bf16
        # ---- Stage 1: right-multiply by the DxD DFT basis (2 matmuls). ----
        r32 = jnp.dot(xb, cd_ref[...], preferred_element_type=jnp.float32)
        i32 = jnp.dot(xb, nsd_ref[...], preferred_element_type=jnp.float32)
        rib = (r32 + i32).astype(jnp.bfloat16)     # R + I (Karatsuba term)
        rb = r32.astype(jnp.bfloat16)
        ib = i32.astype(jnp.bfloat16)

        # ---- Stage 2: left-multiply by the NxN DFT basis (3 matmuls), -----
        # products streamed into the (f32, VMEM) output refs.
        p = jnp.dot(cn_ref[...], rb, preferred_element_type=jnp.float32)   # p1
        re_ref[b] = p
        im_ref[b] = -p
        p = jnp.dot(sn_ref[...], ib, preferred_element_type=jnp.float32)   # p2
        re_ref[b] += p
        im_ref[b] += p
        p = jnp.dot(cms_ref[...], rib, preferred_element_type=jnp.float32)  # p3
        im_ref[b] += p


def _dft_basis(m):
    """cos/sin DFT bases for length m, built in numpy int64/float64 so that
    (i*j) never overflows and the angle stays accurate for large m."""
    idx = np.arange(m, dtype=np.int64)
    kn = (idx[:, None] * idx[None, :]) % m
    ang = (2.0 * np.pi / float(m)) * kn.astype(np.float64)
    return np.cos(ang), np.sin(ang)


def _pick_batch_tile(B, N, D):
    """Largest batch tile TB (a divisor of B) whose per-step working set fits
    the VMEM budget, while keeping >= _MIN_GRID_STEPS grid steps when B allows
    and bounding the unrolled in-kernel batch loop."""
    # Double-buffered per-TB-unit blocks: x (bf16) + re + im (f32).
    per_tb = (2 * 2 + 2 * 2 * 4) * N * D                      # 20 bytes/elem
    # TB-independent: bases (double-buffered, bf16) + per-slice intermediates
    # (r32, i32 f32 + rb, ib, rib bf16 + one live f32 product ~ 18 B/elem).
    fixed = 2 * (3 * N * N + 2 * D * D) * 2 + 18 * N * D
    avail = max(_VMEM_BUDGET_BYTES - fixed, per_tb)
    tb_vmem = max(1, avail // per_tb)
    tb_steps = max(1, B // _MIN_GRID_STEPS)
    target = int(max(1, min(tb_vmem, tb_steps, _MAX_BATCH_TILE, B)))
    tb = 1
    for cand in range(1, target + 1):
        if B % cand == 0:
            tb = cand
    return tb


@functools.partial(jax.jit, static_argnames=("batch_tile",))
def fnet_block(x, batch_tile=None):
    """x: (B, N, D). Returns (real, imag) of fft(fft(x, dim=-1), dim=-2), f32."""
    B, N, D = x.shape
    TB = _pick_batch_tile(B, N, D) if batch_tile is None else batch_tile
    assert B % TB == 0, "batch must be divisible by batch_tile"

    # DFT bases built in f64, combinations folded, then cast to bf16 so the
    # MXU runs native bf16 with f32 accumulation.
    cn64, sn64 = _dft_basis(N)
    cd64, sd64 = _dft_basis(D)
    cn = jnp.asarray(cn64, dtype=jnp.bfloat16)
    sn = jnp.asarray(sn64, dtype=jnp.bfloat16)
    cms = jnp.asarray(cn64 - sn64, dtype=jnp.bfloat16)   # C_N - S_N
    cd = jnp.asarray(cd64, dtype=jnp.bfloat16)
    nsd = jnp.asarray(-sd64, dtype=jnp.bfloat16)         # -S_D (sign folded)
    xb = x.astype(jnp.bfloat16)

    grid = (B // TB,)
    out_sds = jax.ShapeDtypeStruct((B, N, D), jnp.float32)

    x_spec = pl.BlockSpec((TB, N, D), lambda t: (t, 0, 0))
    # Grid-invariant bases: constant index map => fetched once by the pipeline
    # (the double-buffer allocation for them is included in the TB budget).
    nn_spec = pl.BlockSpec((N, N), lambda t: (0, 0))
    dd_spec = pl.BlockSpec((D, D), lambda t: (0, 0))
    out_spec = pl.BlockSpec((TB, N, D), lambda t: (t, 0, 0))

    flops = 4 * B * N * D * D + 6 * B * N * N * D           # 2 + 3 matmuls
    bytes_accessed = (B * N * D * 2                          # x (bf16)
                      + (3 * N * N + 2 * D * D) * 2          # bases (bf16)
                      + 2 * B * N * D * 4)                   # re + im (f32)

    return pl.pallas_call(
        fnet_kernel,
        out_shape=(out_sds, out_sds),
        grid_spec=pltpu.PrefetchScalarGridSpec(
            num_scalar_prefetch=0,
            grid=grid,
            in_specs=[x_spec, nn_spec, nn_spec, nn_spec, dd_spec, dd_spec],
            out_specs=[out_spec, out_spec],
        ),
        compiler_params=pltpu.CompilerParams(
            dimension_semantics=("parallel",),
            vmem_limit_bytes=_VMEM_LIMIT_BYTES),
        cost_estimate=pl.CostEstimate(
            flops=flops, transcendentals=0, bytes_accessed=bytes_accessed),
    )(xb, cn, sn, cms, cd, nsd)


if __name__ == "__main__":
    key = jax.random.PRNGKey(0)
    B, N, D = 2, 8, 32           # batch=2, seq=8, hidden=32
    x = jax.random.normal(key, (B, N, D), dtype=jnp.float32)

    re_out, im_out = fnet_block(x)
    jax.block_until_ready(re_out)
    jax.block_until_ready(im_out)

    # Reference semantics: fft along dim=-1 then dim=-2 (same as the module).
    ref = jnp.fft.fft(jnp.fft.fft(x.astype(jnp.complex64), axis=-1), axis=-2)
    num = jnp.sqrt(jnp.sum((re_out - ref.real) ** 2 + (im_out - ref.imag) ** 2))
    den = jnp.sqrt(jnp.sum(ref.real ** 2 + ref.imag ** 2))
    rel_err = float(num / den)
    # bf16 operands with f32 accumulation: ~0.5-1% relative error expected.
    assert rel_err < 3e-2, f"relative error too large: {rel_err}"

    print("KERNEL_OK")
</pallas_src>

<mosaic_0001>
module attributes {stable_mosaic.version = 11 : i64} {
  func.func @fnet_kernel(%arg0: i32, %arg1: memref<1x8x32xbf16, #tpu.memory_space<vmem>>, %arg2: memref<8x8xbf16, #tpu.memory_space<vmem>>, %arg3: memref<8x8xbf16, #tpu.memory_space<vmem>>, %arg4: memref<8x8xbf16, #tpu.memory_space<vmem>>, %arg5: memref<32x32xbf16, #tpu.memory_space<vmem>>, %arg6: memref<32x32xbf16, #tpu.memory_space<vmem>>, %arg7: memref<1x8x32xf32, #tpu.memory_space<vmem>>, %arg8: memref<1x8x32xf32, #tpu.memory_space<vmem>>) attributes {dimension_semantics = [#tpu.dimension_semantics<parallel>], iteration_bounds = array<i64: 2>, scalar_prefetch = 0 : i64, scratch_operands = 0 : i64, tpu.core_type = #tpu.core_type<tc>, window_params = [{transform_indices = @transform_0, window_bounds = array<i64: 1, 8, 32>}, {pipeline_mode = #tpu.pipeline_mode<synchronous>, transform_indices = @transform_1, window_bounds = array<i64: 8, 8>}, {pipeline_mode = #tpu.pipeline_mode<synchronous>, transform_indices = @transform_2, window_bounds = array<i64: 8, 8>}, {pipeline_mode = #tpu.pipeline_mode<synchronous>, transform_indices = @transform_3, window_bounds = array<i64: 8, 8>}, {pipeline_mode = #tpu.pipeline_mode<synchronous>, transform_indices = @transform_4, window_bounds = array<i64: 32, 32>}, {pipeline_mode = #tpu.pipeline_mode<synchronous>, transform_indices = @transform_5, window_bounds = array<i64: 32, 32>}, {transform_indices = @transform_6, window_bounds = array<i64: 1, 8, 32>}, {transform_indices = @transform_7, window_bounds = array<i64: 1, 8, 32>}]} {
    %c0 = arith.constant 0 : index
    %c0_0 = arith.constant 0 : index
    %c0_1 = arith.constant 0 : index
    %0 = vector.load %arg1[%c0, %c0_0, %c0_1] : memref<1x8x32xbf16, #tpu.memory_space<vmem>>, vector<1x8x32xbf16>
    %1 = vector.shape_cast %0 : vector<1x8x32xbf16> to vector<8x32xbf16>
    %c0_2 = arith.constant 0 : index
    %c0_3 = arith.constant 0 : index
    %2 = vector.load %arg5[%c0_2, %c0_3] : memref<32x32xbf16, #tpu.memory_space<vmem>>, vector<32x32xbf16>
    %cst = arith.constant dense<0.000000e+00> : vector<8x32xf32>
    %3 = tpu.matmul %1, %2, %cst {dimension_numbers = #tpu.dot_dimension_numbers<[1], [0], [0], [1], [0, 0, 1, 1], [], []>} : vector<8x32xbf16>, vector<32x32xbf16>, vector<8x32xf32> -> vector<8x32xf32>
    %c0_4 = arith.constant 0 : index
    %c0_5 = arith.constant 0 : index
    %4 = vector.load %arg6[%c0_4, %c0_5] : memref<32x32xbf16, #tpu.memory_space<vmem>>, vector<32x32xbf16>
    %cst_6 = arith.constant dense<0.000000e+00> : vector<8x32xf32>
    %5 = tpu.matmul %1, %4, %cst_6 {dimension_numbers = #tpu.dot_dimension_numbers<[1], [0], [0], [1], [0, 0, 1, 1], [], []>} : vector<8x32xbf16>, vector<32x32xbf16>, vector<8x32xf32> -> vector<8x32xf32>
    %6 = arith.addf %3, %5 : vector<8x32xf32>
    %7 = arith.truncf %6 : vector<8x32xf32> to vector<8x32xbf16>
    %8 = arith.truncf %3 : vector<8x32xf32> to vector<8x32xbf16>
    %9 = arith.truncf %5 : vector<8x32xf32> to vector<8x32xbf16>
    %c0_7 = arith.constant 0 : index
    %c0_8 = arith.constant 0 : index
    %10 = vector.load %arg2[%c0_7, %c0_8] : memref<8x8xbf16, #tpu.memory_space<vmem>>, vector<8x8xbf16>
    %cst_9 = arith.constant dense<0.000000e+00> : vector<8x32xf32>
    %11 = tpu.matmul %10, %8, %cst_9 {dimension_numbers = #tpu.dot_dimension_numbers<[1], [0], [0], [1], [0, 0, 1, 1], [], []>} : vector<8x8xbf16>, vector<8x32xbf16>, vector<8x32xf32> -> vector<8x32xf32>
    %c0_10 = arith.constant 0 : index
    %c0_11 = arith.constant 0 : index
    %c0_12 = arith.constant 0 : index
    %12 = vector.load %arg7[%c0_10, %c0_11, %c0_12] : memref<1x8x32xf32, #tpu.memory_space<vmem>>, vector<1x8x32xf32>
    %13 = vector.shape_cast %12 : vector<1x8x32xf32> to vector<8x32xf32>
    %14 = vector.shape_cast %11 : vector<8x32xf32> to vector<1x8x32xf32>
    tpu.vector_store %arg7[%c0_10, %c0_11, %c0_12], %14 {strides = array<i32>} : memref<1x8x32xf32, #tpu.memory_space<vmem>>, vector<1x8x32xf32>,
    %cst_13 = arith.constant 0.000000e+00 : f32
    %15 = vector.broadcast %cst_13 : f32 to vector<8x32xf32>
    %16 = arith.subf %15, %11 : vector<8x32xf32>
    %c0_14 = arith.constant 0 : index
    %c0_15 = arith.constant 0 : index
    %c0_16 = arith.constant 0 : index
    %17 = vector.load %arg8[%c0_14, %c0_15, %c0_16] : memref<1x8x32xf32, #tpu.memory_space<vmem>>, vector<1x8x32xf32>
    %18 = vector.shape_cast %17 : vector<1x8x32xf32> to vector<8x32xf32>
    %19 = vector.shape_cast %16 : vector<8x32xf32> to vector<1x8x32xf32>
    tpu.vector_store %arg8[%c0_14, %c0_15, %c0_16], %19 {strides = array<i32>} : memref<1x8x32xf32, #tpu.memory_space<vmem>>, vector<1x8x32xf32>,
    %c0_17 = arith.constant 0 : index
    %c0_18 = arith.constant 0 : index
    %20 = vector.load %arg3[%c0_17, %c0_18] : memref<8x8xbf16, #tpu.memory_space<vmem>>, vector<8x8xbf16>
    %cst_19 = arith.constant dense<0.000000e+00> : vector<8x32xf32>
    %21 = tpu.matmul %20, %9, %cst_19 {dimension_numbers = #tpu.dot_dimension_numbers<[1], [0], [0], [1], [0, 0, 1, 1], [], []>} : vector<8x8xbf16>, vector<8x32xbf16>, vector<8x32xf32> -> vector<8x32xf32>
    %c0_20 = arith.constant 0 : index
    %c0_21 = arith.constant 0 : index
    %c0_22 = arith.constant 0 : index
    %22 = vector.load %arg7[%c0_20, %c0_21, %c0_22] : memref<1x8x32xf32, #tpu.memory_space<vmem>>, vector<1x8x32xf32>
    %23 = vector.shape_cast %22 : vector<1x8x32xf32> to vector<8x32xf32>
    %24 = arith.addf %23, %21 : vector<8x32xf32>
    %c0_23 = arith.constant 0 : index
    %c0_24 = arith.constant 0 : index
    %c0_25 = arith.constant 0 : index
    %25 = vector.load %arg7[%c0_23, %c0_24, %c0_25] : memref<1x8x32xf32, #tpu.memory_space<vmem>>, vector<1x8x32xf32>
    %26 = vector.shape_cast %25 : vector<1x8x32xf32> to vector<8x32xf32>
    %27 = vector.shape_cast %24 : vector<8x32xf32> to vector<1x8x32xf32>
    tpu.vector_store %arg7[%c0_23, %c0_24, %c0_25], %27 {strides = array<i32>} : memref<1x8x32xf32, #tpu.memory_space<vmem>>, vector<1x8x32xf32>,
    %c0_26 = arith.constant 0 : index
    %c0_27 = arith.constant 0 : index
    %c0_28 = arith.constant 0 : index
    %28 = vector.load %arg8[%c0_26, %c0_27, %c0_28] : memref<1x8x32xf32, #tpu.memory_space<vmem>>, vector<1x8x32xf32>
    %29 = vector.shape_cast %28 : vector<1x8x32xf32> to vector<8x32xf32>
    %30 = arith.addf %29, %21 : vector<8x32xf32>
    %c0_29 = arith.constant 0 : index
    %c0_30 = arith.constant 0 : index
    %c0_31 = arith.constant 0 : index
    %31 = vector.load %arg8[%c0_29, %c0_30, %c0_31] : memref<1x8x32xf32, #tpu.memory_space<vmem>>, vector<1x8x32xf32>
    %32 = vector.shape_cast %31 : vector<1x8x32xf32> to vector<8x32xf32>
    %33 = vector.shape_cast %30 : vector<8x32xf32> to vector<1x8x32xf32>
    tpu.vector_store %arg8[%c0_29, %c0_30, %c0_31], %33 {strides = array<i32>} : memref<1x8x32xf32, #tpu.memory_space<vmem>>, vector<1x8x32xf32>,
    %c0_32 = arith.constant 0 : index
    %c0_33 = arith.constant 0 : index
    %34 = vector.load %arg4[%c0_32, %c0_33] : memref<8x8xbf16, #tpu.memory_space<vmem>>, vector<8x8xbf16>
    %cst_34 = arith.constant dense<0.000000e+00> : vector<8x32xf32>
    %35 = tpu.matmul %34, %7, %cst_34 {dimension_numbers = #tpu.dot_dimension_numbers<[1], [0], [0], [1], [0, 0, 1, 1], [], []>} : vector<8x8xbf16>, vector<8x32xbf16>, vector<8x32xf32> -> vector<8x32xf32>
    %c0_35 = arith.constant 0 : index
    %c0_36 = arith.constant 0 : index
    %c0_37 = arith.constant 0 : index
    %36 = vector.load %arg8[%c0_35, %c0_36, %c0_37] : memref<1x8x32xf32, #tpu.memory_space<vmem>>, vector<1x8x32xf32>
    %37 = vector.shape_cast %36 : vector<1x8x32xf32> to vector<8x32xf32>
    %38 = arith.addf %37, %35 : vector<8x32xf32>
    %c0_38 = arith.constant 0 : index
    %c0_39 = arith.constant 0 : index
    %c0_40 = arith.constant 0 : index
    %39 = vector.load %arg8[%c0_38, %c0_39, %c0_40] : memref<1x8x32xf32, #tpu.memory_space<vmem>>, vector<1x8x32xf32>
    %40 = vector.shape_cast %39 : vector<1x8x32xf32> to vector<8x32xf32>
    %41 = vector.shape_cast %38 : vector<8x32xf32> to vector<1x8x32xf32>
    tpu.vector_store %arg8[%c0_38, %c0_39, %c0_40], %41 {strides = array<i32>} : memref<1x8x32xf32, #tpu.memory_space<vmem>>, vector<1x8x32xf32>,
    return
  }
  func.func @transform_0(%arg0: i32) -> (i32, i32, i32) {
    %c0_i32 = arith.constant 0 : i32
    %c0_i32_0 = arith.constant 0 : i32
    %c0_i32_1 = arith.constant 0 : i32
    return %arg0, %c0_i32, %c0_i32_0 : i32, i32, i32
  }
  func.func @transform_1(%arg0: i32) -> (i32, i32) {
    %c0_i32 = arith.constant 0 : i32
    %c0_i32_0 = arith.constant 0 : i32
    %c0_i32_1 = arith.constant 0 : i32
    return %c0_i32, %c0_i32_0 : i32, i32
  }
  func.func @transform_2(%arg0: i32) -> (i32, i32) {
    %c0_i32 = arith.constant 0 : i32
    %c0_i32_0 = arith.constant 0 : i32
    %c0_i32_1 = arith.constant 0 : i32
    return %c0_i32, %c0_i32_0 : i32, i32
  }
  func.func @transform_3(%arg0: i32) -> (i32, i32) {
    %c0_i32 = arith.constant 0 : i32
    %c0_i32_0 = arith.constant 0 : i32
    %c0_i32_1 = arith.constant 0 : i32
    return %c0_i32, %c0_i32_0 : i32, i32
  }
  func.func @transform_4(%arg0: i32) -> (i32, i32) {
    %c0_i32 = arith.constant 0 : i32
    %c0_i32_0 = arith.constant 0 : i32
    %c0_i32_1 = arith.constant 0 : i32
    return %c0_i32, %c0_i32_0 : i32, i32
  }
  func.func @transform_5(%arg0: i32) -> (i32, i32) {
    %c0_i32 = arith.constant 0 : i32
    %c0_i32_0 = arith.constant 0 : i32
    %c0_i32_1 = arith.constant 0 : i32
    return %c0_i32, %c0_i32_0 : i32, i32
  }
  func.func @transform_6(%arg0: i32) -> (i32, i32, i32) {
    %c0_i32 = arith.constant 0 : i32
    %c0_i32_0 = arith.constant 0 : i32
    %c0_i32_1 = arith.constant 0 : i32
    return %arg0, %c0_i32, %c0_i32_0 : i32, i32, i32
  }
  func.func @transform_7(%arg0: i32) -> (i32, i32, i32) {
    %c0_i32 = arith.constant 0 : i32
    %c0_i32_0 = arith.constant 0 : i32
    %c0_i32_1 = arith.constant 0 : i32
    return %arg0, %c0_i32, %c0_i32_0 : i32, i32, i32
  }
}

</mosaic_0001>

<llo_original>
// kernel: fnet_block.1
$region0: #{fnet_block.1}
  #allocation0 [shape = 'u32[]', space=smem, size = 0x4, offset = 0x4, fixed_abs, tag = 'smem constant byte address 0x4 - core index']
  #allocation1 [shape = 'u32[72,128]{1,0:T(1,128)}', space=vmem, size = 0x9000, scoped, tag = 'internal scratch']
  %s0 = inlined_call_operand.vmem [shape: bf16[2,8,32], index: 0, kind: input, shape index: {}]
  %s1 = inlined_call_operand.vmem [shape: bf16[8,8], index: 1, kind: input, shape index: {}]
  %s2 = inlined_call_operand.vmem [shape: bf16[8,8], index: 2, kind: input, shape index: {}]
  %s3 = inlined_call_operand.vmem [shape: bf16[8,8], index: 3, kind: input, shape index: {}]
  %s4 = inlined_call_operand.hbm [shape: bf16[32,32], index: 4, kind: input, shape index: {}]
  %s5 = inlined_call_operand.vmem [shape: bf16[32,32], index: 5, kind: input, shape index: {}]
  %s6 = inlined_call_operand.hbm [shape: f32[2,8,32], index: 6, kind: output, shape index: {0}]
  %s7 = inlined_call_operand.hbm [shape: f32[2,8,32], index: 7, kind: output, shape index: {1}]
  %8 = xla_tuple %s6, %s7
  %s9 = sld [smem:[#allocation0]]
  $region69: #{fnet_block.1} parent=0
    _
  %s11 = ssub.s32 1, %s9
  %s12 = scalar_select 0, %s11, %s9
  $region1: #{fnet_block.1} parent=0
    #allocation2 [shape = 'u8[8192]{0}', space=vmem, size = 0x2000, scoped, tag = 'input window, operand 4, single buffered']
    #allocation3 [shape = 's32[2]{0}', space=sflag, size = 0x8, scoped, tag = 'scoped memory for fnet_block.1']
    #allocation4 [shape = 's32[2]{0}', space=sflag, size = 0x8, scoped, tag = 'scoped memory for fnet_block.1']
    #allocation5 [shape = 'u8[8192]{0}', space=vmem, size = 0x2000, scoped, tag = 'output window, operand 0']
    #allocation6 [shape = 'u8[8192]{0}', space=vmem, size = 0x2000, scoped, tag = 'output window, operand 1']
    #allocation7 [shape = 's32[2]{0}', space=sflag, size = 0x8, scoped, tag = 'scoped memory for fnet_block.1']
    %13 = vsyncpa [#allocation3], 0
    %14 = vsyncpa [#allocation4], 0
    %s15 = scalar_lea.sflag [#allocation4], 1
    %16 = vsyncpa %s15, 0
    %17 = vsyncpa [#allocation7], 0
    %s18 = scalar_lea.sflag [#allocation7], 1
    %19 = vsyncpa %s18, 0
    loop: start=0, step=1, limit=4
    $region2: #{fnet_block.1} parent=1 // loop_pre_header
      _
    $region3: #{fnet_block.1} parent=1 // loop_header
      %s21 = sphi 0, %s25
      %p22 = scmp.ge.s32.totalorder %s21, 4
      %s31 = sphi 0, %s33
      %s34 = sphi 0, %s31
      %s35 = sphi 0, %s34
      %s51 = sphi 0, %s35
      %s55 = sphi 0, %s55
      %s57 = sphi 0, %s55
      %s58 = sphi 0, %s57
      %s72 = sphi 0, %s58
      %s76 = sphi 0, %s76
      %s78 = sphi 0, %s76
      %s79 = sphi 0, %s78
      %s93 = sphi 0, %s79
      %s97 = sphi 0, %s97
      %s99 = sphi 0, %s97
      %s100 = sphi 0, %s99
      %s114 = sphi 0, %s100
      %s118 = sphi 0, %s118
      %s120 = sphi 0, %s118
      %s121 = sphi 0, %s120
      %s135 = sphi 0, %s121
      %s139 = sphi 0, %s139
      %s141 = sphi 0, %s139
      %s142 = sphi 0, %s141
      %s156 = sphi 0, %s142
      %s162 = sphi 0, %s164
      %s165 = sphi 0, %s162
      %s166 = sphi 0, %s165
      %s182 = sphi 0, %s166
      %s188 = sphi 0, %s190
      %s191 = sphi 0, %s188
      %s192 = sphi 0, %s191
      %s208 = sphi 0, %s192
    $region4: #{fnet_block.1} parent=1 // loop_header_branch
      %24 = sbr.rel (%p22) target = $region8
    $region5: #{fnet_block.1} parent=1 // loop_body
      %s26 = ssub.s32 %s21, 1
      %s27 = ssub.s32 %s21, 2
      %s28 = sadd.s32 %s21, 1
      %s29 = ssub.s32 %s21, %s28
      %p30 = scmp.eq.s32.totalorder %s29, 0
      %s32 = sadd.s32 %s31, 1
      %s33 = scalar_select %p30, %s31, %s32
      %p36 = pneg %p30
      %p37 = scmp.eq.s32.totalorder %s21, 1
      %p38 = por %p36, %p37
      %p39 = scmp.ne.s32.totalorder %s31, %s34
      %p40 = scmp.eq.s32.totalorder %s21, 0
      %p41 = por %p39, %p40
      %p42 = scmp.ne.s32.totalorder %s31, %s34
      %p43 = scmp.eq.s32.totalorder %s26, 1
      %p44 = por %p42, %p43
      %p45 = scmp.ne.s32.totalorder %s34, %s35
      %p46 = scmp.eq.s32.totalorder %s26, 0
      %p47 = por %p45, %p46
      %p48 = scmp.ne.s32.totalorder %s34, %s35
      %p49 = scmp.eq.s32.totalorder %s27, 1
      %p50 = por %p48, %p49
      %p52 = scmp.ne.s32.totalorder %s35, %s51
      %p53 = scmp.eq.s32.totalorder %s27, 0
      %p54 = por %p52, %p53
      %s56 = sadd.s32 %s55, 1
      %p59 = scmp.eq.s32.totalorder %s21, 1
      %p60 = scmp.ne.s32.totalorder %s55, %s57
      %p61 = scmp.eq.s32.totalorder %s21, 0
      %p62 = por %p60, %p61
      %p63 = scmp.ne.s32.totalorder %s55, %s57
      %p64 = scmp.eq.s32.totalorder %s26, 1
      %p65 = por %p63, %p64
      %p66 = scmp.ne.s32.totalorder %s57, %s58
      %p67 = scmp.eq.s32.totalorder %s26, 0
      %p68 = por %p66, %p67
      %p69 = scmp.ne.s32.totalorder %s57, %s58
      %p70 = scmp.eq.s32.totalorder %s27, 1
      %p71 = por %p69, %p70
      %p73 = scmp.ne.s32.totalorder %s58, %s72
      %p74 = scmp.eq.s32.totalorder %s27, 0
      %p75 = por %p73, %p74
      %s77 = sadd.s32 %s76, 1
      %p80 = scmp.eq.s32.totalorder %s21, 1
      %p81 = scmp.ne.s32.totalorder %s76, %s78
      %p82 = scmp.eq.s32.totalorder %s21, 0
      %p83 = por %p81, %p82
      %p84 = scmp.ne.s32.totalorder %s76, %s78
      %p85 = scmp.eq.s32.totalorder %s26, 1
      %p86 = por %p84, %p85
      %p87 = scmp.ne.s32.totalorder %s78, %s79
      %p88 = scmp.eq.s32.totalorder %s26, 0
      %p89 = por %p87, %p88
      %p90 = scmp.ne.s32.totalorder %s78, %s79
      %p91 = scmp.eq.s32.totalorder %s27, 1
      %p92 = por %p90, %p91
      %p94 = scmp.ne.s32.totalorder %s79, %s93
      %p95 = scmp.eq.s32.totalorder %s27, 0
      %p96 = por %p94, %p95
      %s98 = sadd.s32 %s97, 1
      %p101 = scmp.eq.s32.totalorder %s21, 1
      %p102 = scmp.ne.s32.totalorder %s97, %s99
      %p103 = scmp.eq.s32.totalorder %s21, 0
      %p104 = por %p102, %p103
      %p105 = scmp.ne.s32.totalorder %s97, %s99
      %p106 = scmp.eq.s32.totalorder %s26, 1
      %p107 = por %p105, %p106
      %p108 = scmp.ne.s32.totalorder %s99, %s100
      %p109 = scmp.eq.s32.totalorder %s26, 0
      %p110 = por %p108, %p109
      %p111 = scmp.ne.s32.totalorder %s99, %s100
      %p112 = scmp.eq.s32.totalorder %s27, 1
      %p113 = por %p111, %p112
      %p115 = scmp.ne.s32.totalorder %s100, %s114
      %p116 = scmp.eq.s32.totalorder %s27, 0
      %p117 = por %p115, %p116
      %s119 = sadd.s32 %s118, 1
      %p122 = scmp.eq.s32.totalorder %s21, 1
      %p123 = scmp.ne.s32.totalorder %s118, %s120
      %p124 = scmp.eq.s32.totalorder %s21, 0
      %p125 = por %p123, %p124
      %p126 = scmp.ne.s32.totalorder %s118, %s120
      %p127 = scmp.eq.s32.totalorder %s26, 1
      %p128 = por %p126, %p127
      %p129 = scmp.ne.s32.totalorder %s120, %s121
      %p130 = scmp.eq.s32.totalorder %s26, 0
      %p131 = por %p129, %p130
      %p132 = scmp.ne.s32.totalorder %s120, %s121
      %p133 = scmp.eq.s32.totalorder %s27, 1
      %p134 = por %p132, %p133
      %p136 = scmp.ne.s32.totalorder %s121, %s135
      %p137 = scmp.eq.s32.totalorder %s27, 0
      %p138 = por %p136, %p137
      %s140 = sadd.s32 %s139, 1
      %p143 = scmp.eq.s32.totalorder %s21, 1
      %p144 = scmp.ne.s32.totalorder %s139, %s141
      %p145 = scmp.eq.s32.totalorder %s21, 0
      %p146 = por %p144, %p145
      %p147 = scmp.ne.s32.totalorder %s139, %s141
      %p148 = scmp.eq.s32.totalorder %s26, 1
      %p149 = por %p147, %p148
      %p150 = scmp.ne.s32.totalorder %s141, %s142
      %p151 = scmp.eq.s32.totalorder %s26, 0
      %p152 = por %p150, %p151
      %p153 = scmp.ne.s32.totalorder %s141, %s142
      %p154 = scmp.eq.s32.totalorder %s27, 1
      %p155 = por %p153, %p154
      %p157 = scmp.ne.s32.totalorder %s142, %s156
      %p158 = scmp.eq.s32.totalorder %s27, 0
      %p159 = por %p157, %p158
      %s160 = ssub.s32 %s21, %s28
      %p161 = scmp.eq.s32.totalorder %s160, 0
      %s163 = sadd.s32 %s162, 1
      %s164 = scalar_select %p161, %s162, %s163
      %p167 = pneg %p161
      %p168 = scmp.eq.s32.totalorder %s21, 1
      %p169 = por %p167, %p168
      %p170 = scmp.ne.s32.totalorder %s162, %s165
      %p171 = scmp.eq.s32.totalorder %s21, 0
      %p172 = por %p170, %p171
      %p173 = scmp.ne.s32.totalorder %s162, %s165
      %p174 = scmp.eq.s32.totalorder %s26, 1
      %p175 = por %p173, %p174
      %p176 = scmp.ne.s32.totalorder %s165, %s166
      %p177 = scmp.eq.s32.totalorder %s26, 0
      %p178 = por %p176, %p177
      %p179 = scmp.ne.s32.totalorder %s165, %s166
      %p180 = scmp.eq.s32.totalorder %s27, 1
      %p181 = por %p179, %p180
      %p183 = scmp.ne.s32.totalorder %s166, %s182
      %p184 = scmp.eq.s32.totalorder %s27, 0
      %p185 = por %p183, %p184
      %s186 = ssub.s32 %s21, %s28
      %p187 = scmp.eq.s32.totalorder %s186, 0
      %s189 = sadd.s32 %s188, 1
      %s190 = scalar_select %p187, %s188, %s189
      %p193 = pneg %p187
      %p194 = scmp.eq.s32.totalorder %s21, 1
      %p195 = por %p193, %p194
      %p196 = scmp.ne.s32.totalorder %s188, %s191
      %p197 = scmp.eq.s32.totalorder %s21, 0
      %p198 = por %p196, %p197
      %p199 = scmp.ne.s32.totalorder %s188, %s191
      %p200 = scmp.eq.s32.totalorder %s26, 1
      %p201 = por %p199, %p200
      %p202 = scmp.ne.s32.totalorder %s191, %s192
      %p203 = scmp.eq.s32.totalorder %s26, 0
      %p204 = por %p202, %p203
      %p205 = scmp.ne.s32.totalorder %s191, %s192
      %p206 = scmp.eq.s32.totalorder %s27, 1
      %p207 = por %p205, %p206
      %p209 = scmp.ne.s32.totalorder %s192, %s208
      %p210 = scmp.eq.s32.totalorder %s27, 0
      %p211 = por %p209, %p210
      %p212 = scmp.le.s32.totalorder 1, %s21
      %p213 = scmp.lt.s32.totalorder %s21, 3
      %p214 = pnand %p212, %p213
      %p215 = pneg %p214
      // Predicated region
      $region9: #{fnet_block.1} parent=5 // pred_check
        _
      $region10: #{fnet_block.1} parent=5 // pred_check_branch
        %217 = sbr.rel (%p214) target = $region12
      $region11: #{fnet_block.1} parent=5 // pred_region
        %s218 = ssub.s32 %s21, 1
        // Predicated region
        $region13: #{fnet_block.1} parent=11 // pred_check
          %p219 = pneg %p68
        $region14: #{fnet_block.1} parent=11 // pred_check_branch
          %221 = sbr.rel (%p219) target = $region16
        $region15: #{fnet_block.1} parent=11 // pred_region
          _
        $region16: #{fnet_block.1} parent=11 // pred_fallthru
          _
        // Predicated region
        $region17: #{fnet_block.1} parent=11 // pred_check
          %p222 = pneg %p89
        $region18: #{fnet_block.1} parent=11 // pred_check_branch
          %224 = sbr.rel (%p222) target = $region20
        $region19: #{fnet_block.1} parent=11 // pred_region
          _
        $region20: #{fnet_block.1} parent=11 // pred_fallthru
          _
        // Predicated region
        $region21: #{fnet_block.1} parent=11 // pred_check
          %p225 = pneg %p110
        $region22: #{fnet_block.1} parent=11 // pred_check_branch
          %227 = sbr.rel (%p225) target = $region24
        $region23: #{fnet_block.1} parent=11 // pred_region
          _
        $region24: #{fnet_block.1} parent=11 // pred_fallthru
          _
        // Predicated region
        $region25: #{fnet_block.1} parent=11 // pred_check
          %p228 = pneg %p131
        $region26: #{fnet_block.1} parent=11 // pred_check_branch
          %230 = sbr.rel (%p228) target = $region28
        $region27: #{fnet_block.1} parent=11 // pred_region
          %232 = vsyncadd [#allocation3], 0
          %s233 = sshll.u32 %s4, 4
          %s234 = int_to_ptr.hbm [resolvable:$true] %s233
          %s235 = sshll.u32 [#allocation2], 4
          %s236 = int_to_ptr.vmem [resolvable:$true] %s235
          %241 = dma.hbm_to_vmem [thread:$0]  %s234, 256, %s236, [#allocation3], 64, 64, 4
        $region28: #{fnet_block.1} parent=11 // pred_fallthru
          _
        // Predicated region
        $region29: #{fnet_block.1} parent=11 // pred_check
          %p242 = pneg %p152
        $region30: #{fnet_block.1} parent=11 // pred_check_branch
          %244 = sbr.rel (%p242) target = $region32
        $region31: #{fnet_block.1} parent=11 // pred_region
          _
        $region32: #{fnet_block.1} parent=11 // pred_fallthru
          _
      $region12: #{fnet_block.1} parent=5 // pred_fallthru
        _
      %p245 = scmp.lt.s32.totalorder %s21, 2
      // Predicated region
      $region33: #{fnet_block.1} parent=5 // pred_check
        %p246 = pneg %p245
      $region34: #{fnet_block.1} parent=5 // pred_check_branch
        %248 = sbr.rel (%p246) target = $region36
      $region35: #{fnet_block.1} parent=5 // pred_region
        // Predicated region
        $region37: #{fnet_block.1} parent=35 // pred_check
          %p249 = pneg %p41
        $region38: #{fnet_block.1} parent=35 // pred_check_branch
          %251 = sbr.rel (%p249) target = $region40
        $region39: #{fnet_block.1} parent=35 // pred_region
          %p252 = scmp.lt.s32.totalorder %s21, 1
          %s253 = scalar_select %p252, %s21, 1
          %s254 = smul.addr %s253, 4
          %s255 = scalar_lea.vmem %s0, %s254
        $region40: #{fnet_block.1} parent=35 // pred_fallthru
          _
      $region36: #{fnet_block.1} parent=5 // pred_fallthru
        _
      %p256 = scmp.le.s32.totalorder 1, %s21
      %p257 = scmp.lt.s32.totalorder %s21, 3
      %p258 = pnand %p256, %p257
      %p259 = pneg %p258
      // Predicated region
      $region41: #{fnet_block.1} parent=5 // pred_check
        _
      $region42: #{fnet_block.1} parent=5 // pred_check_branch
        %261 = sbr.rel (%p258) target = $region44
      $region43: #{fnet_block.1} parent=5 // pred_region
        %s262 = ssub.s32 %s21, 1
        // Predicated region
        $region45: #{fnet_block.1} parent=43 // pred_check
          %p263 = pneg %p131
        $region46: #{fnet_block.1} parent=43 // pred_check_branch
          %265 = sbr.rel (%p263) target = $region48
        $region47: #{fnet_block.1} parent=43 // pred_region
          %267 = dma.done [#allocation3], 256
        $region48: #{fnet_block.1} parent=43 // pred_fallthru
          _
        %p268 = scmp.lt.s32.totalorder %s26, 1
        %s269 = scalar_select %p268, %s26, 1
        %s270 = smul.addr %s269, 4
        %s271 = scalar_lea.vmem %s0, %s270
        %p272 = pneg %p47
        %p273 = pneg %p44
        %p274 = pneg %p68
        %p275 = pneg %p65
        %p276 = pneg %p89
        %p277 = pneg %p86
        %p278 = pneg %p110
        %p279 = pneg %p107
        %p280 = pneg %p131
        %p281 = pneg %p128
        %p282 = pneg %p152
        %p283 = pneg %p149
        %p284 = pneg %p178
        %p285 = pneg %p175
        %s286 = sand.u32 %s165, 1
        %s287 = scalar_lea.sflag [#allocation4], %s286
        %s288 = sand.u32 %s165, 1
        %s289 = smul.addr %s288, 8
        %s290 = scalar_lea.vmem [#allocation5], %s289
        %p291 = pneg %p204
        %p292 = pneg %p201
        %s293 = sand.u32 %s191, 1
        %s294 = scalar_lea.sflag [#allocation7], %s293
        %s295 = sand.u32 %s191, 1
        %s296 = smul.addr %s295, 8
        %s297 = scalar_lea.vmem [#allocation6], %s296
        %p298 = scmp.lt.s32.totalorder %s26, 1
        %s299 = scalar_select %p298, %s26, 1
        %s300 = smul.addr %s299, 4
        %s301 = scalar_lea.vmem %s0, %s300
        %v303 = vld [vmem:[%s301] sm:$0xf]
        %v304 = vld [vmem:[#allocation2] sm:$0xf]
        %v305 = vld [vmem:[#allocation2 + $0x4] sm:$0xf]
        %v306 = vld [vmem:[#allocation2 + $0x8] sm:$0xf]
        %v307 = vld [vmem:[#allocation2 + $0xc] sm:$0xf]
        %v312 = vunpack.c.l.b16 %v304
        %v313 = vunpack.c.l.b16 %v305
        %v314 = vunpack.c.l.b16 %v306
        %v315 = vunpack.c.l.b16 %v307
        %v316 = vpack.c.b16 %v313, %v312
        %v317 = vpack.c.b16 %v315, %v314
        %vm320 = vcmask 261120
        %v322 = vsel %vm320, %v303, 0
        %324 = vmatpush.bf16.msra.mxu0 0
        %325 = vmatpush.bf16.msra.mxu0 0
        %326 = vmatpush.bf16.msra.mxu0 0
        %327 = vmatpush.bf16.msra.mxu0 0
        %328 = vmatpush.bf16.msra.mxu0 0
        %329 = vmatpush.bf16.msra.mxu0 0
        %330 = vmatpush.bf16.msra.mxu0 %v317
        %331 = vmatpush.bf16.msra.mxu0 %v316
        %332 = vmatmul.bf16.gmra.mxu0 %v322
        %v333 = vpop.f32.mrf.mxu0
        %v334 = vadd.f32 0.0, %v333
        %v335 = vpop.f32.mrf.mxu0
        %336 = vdwg.mxu0
        %v337 = vld [vmem:[%s5] sm:$0xf]
        %v338 = vld [vmem:[%s5 + $0x4] sm:$0xf]
        %v339 = vld [vmem:[%s5 + $0x8] sm:$0xf]
        %v340 = vld [vmem:[%s5 + $0xc] sm:$0xf]
        %v345 = vunpack.c.l.b16 %v337
        %v346 = vunpack.c.l.b16 %v338
        %v347 = vunpack.c.l.b16 %v339
        %v348 = vunpack.c.l.b16 %v340
        %v349 = vpack.c.b16 %v346, %v345
        %v350 = vpack.c.b16 %v348, %v347
        %353 = vmatpush.bf16.msra.mxu0 0
        %354 = vmatpush.bf16.msra.mxu0 0
        %355 = vmatpush.bf16.msra.mxu0 0
        %356 = vmatpush.bf16.msra.mxu0 0
        %357 = vmatpush.bf16.msra.mxu0 0
        %358 = vmatpush.bf16.msra.mxu0 0
        %359 = vmatpush.bf16.msra.mxu0 %v350
        %360 = vmatpush.bf16.msra.mxu0 %v349
        %361 = vmatmul.bf16.gmra.mxu0 %v322
        %v362 = vpop.f32.mrf.mxu0
        %v363 = vadd.f32 0.0, %v362
        %v364 = vpop.f32.mrf.mxu0
        %365 = vdwg.mxu0
        %v366 = vadd.f32 %v334, %v363
        %v367 = vpack.c.bf16 %v366, %v366
        %v368 = vpack.c.bf16 %v334, %v334
        %v369 = vpack.c.bf16 %v363, %v363
        %v370 = vld [vmem:[%s1] sm:$0xf]
        %vm371 = vcmask 64512
        %v373 = vsel %vm371, %v370, 0
        %vm375 = vcmask 1043456
        %v377 = vsel %vm375, %v368, 0
        %379 = vmatpush.bf16.msra.mxu0 0
        %380 = vmatpush.bf16.msra.mxu0 0
        %381 = vmatpush.bf16.msra.mxu0 0
        %382 = vmatpush.bf16.msra.mxu0 0
        %383 = vmatpush.bf16.msra.mxu0 0
        %384 = vmatpush.bf16.msra.mxu0 0
        %385 = vmatpush.bf16.msra.mxu0 0
        %386 = vmatpush.bf16.msra.mxu0 %v377
        %387 = vmatmul.bf16.gmra.mxu0 %v373
        %v388 = vpop.f32.mrf.mxu0
        %v389 = vadd.f32 0.0, %v388
        %v390 = vpop.f32.mrf.mxu0
        %391 = vdwg.mxu0
        %392 = vst.msk [vmem:[%s290] sm:$0xff] %vm320, %v389
        %v393 = vsub.f32 0.0, %v389
        %394 = vst.msk [vmem:[%s297] sm:$0xff] %vm320, %v393
        %v395 = vld [vmem:[%s2] sm:$0xf]
        %v397 = vsel %vm371, %v395, 0
        %v400 = vsel %vm375, %v369, 0
        %402 = vmatpush.bf16.msra.mxu0 0
        %403 = vmatpush.bf16.msra.mxu0 0
        %404 = vmatpush.bf16.msra.mxu0 0
        %405 = vmatpush.bf16.msra.mxu0 0
        %406 = vmatpush.bf16.msra.mxu0 0
        %407 = vmatpush.bf16.msra.mxu0 0
        %408 = vmatpush.bf16.msra.mxu0 0
        %409 = vmatpush.bf16.msra.mxu0 %v400
        %410 = vmatmul.bf16.gmra.mxu0 %v397
        %v411 = vpop.f32.mrf.mxu0
        %v412 = vadd.f32 0.0, %v411
        %v413 = vpop.f32.mrf.mxu0
        %414 = vdwg.mxu0
        %v415 = vld [vmem:[%s290] sm:$0xff]
        %v416 = vadd.f32 %v415, %v412
        %417 = vst.msk [vmem:[%s290] sm:$0xff] %vm320, %v416
        %v418 = vld [vmem:[%s297] sm:$0xff]
        %v419 = vadd.f32 %v418, %v412
        %420 = vst.msk [vmem:[%s297] sm:$0xff] %vm320, %v419
        %v421 = vld [vmem:[%s3] sm:$0xf]
        %v423 = vsel %vm371, %v421, 0
        %v426 = vsel %vm375, %v367, 0
        %428 = vmatpush.bf16.msra.mxu0 0
        %429 = vmatpush.bf16.msra.mxu0 0
        %430 = vmatpush.bf16.msra.mxu0 0
        %431 = vmatpush.bf16.msra.mxu0 0
        %432 = vmatpush.bf16.msra.mxu0 0
        %433 = vmatpush.bf16.msra.mxu0 0
        %434 = vmatpush.bf16.msra.mxu0 0
        %435 = vmatpush.bf16.msra.mxu0 %v426
        %436 = vmatmul.bf16.gmra.mxu0 %v423
        %v437 = vpop.f32.mrf.mxu0
        %v438 = vadd.f32 0.0, %v437
        %v439 = vpop.f32.mrf.mxu0
        %440 = vdwg.mxu0
        %v441 = vld [vmem:[%s297] sm:$0xff]
        %v442 = vadd.f32 %v441, %v438
        %443 = vst.msk [vmem:[%s297] sm:$0xff] %vm320, %v442
        %s444 = sand.u32 %s165, 1
        %s445 = scalar_lea.sflag [#allocation4], %s444
        %s446 = sand.u32 %s165, 1
        %s447 = smul.addr %s446, 8
        %s448 = scalar_lea.vmem [#allocation5], %s447
        %s449 = sand.u32 %s191, 1
        %s450 = scalar_lea.sflag [#allocation7], %s449
        %s451 = sand.u32 %s191, 1
        %s452 = smul.addr %s451, 8
        %s453 = scalar_lea.vmem [#allocation6], %s452
        // Predicated region
        $region49: #{fnet_block.1} parent=43 // pred_check
          %p454 = pneg %p175
        $region50: #{fnet_block.1} parent=43 // pred_check_branch
          %456 = sbr.rel (%p454) target = $region52
        $region51: #{fnet_block.1} parent=43 // pred_region
          %458 = vsyncadd %s445, 0
          %s459 = smul.addr %s26, 8
          %s460 = scalar_lea.hbm %s6, %s459
          %s462 = sshll.u32 %s448, 4
          %s463 = int_to_ptr.vmem [resolvable:$true] %s462
          %s464 = sshll.u32 %s460, 4
          %s465 = int_to_ptr.hbm [resolvable:$true] %s464
          %467 = dma.vmem_to_hbm [thread:$0]  %s463, 128, %s465, %s445
        $region52: #{fnet_block.1} parent=43 // pred_fallthru
          _
        // Predicated region
        $region53: #{fnet_block.1} parent=43 // pred_check
          %p468 = pneg %p201
        $region54: #{fnet_block.1} parent=43 // pred_check_branch
          %470 = sbr.rel (%p468) target = $region56
        $region55: #{fnet_block.1} parent=43 // pred_region
          %472 = vsyncadd %s450, 0
          %s473 = smul.addr %s26, 8
          %s474 = scalar_lea.hbm %s7, %s473
          %s476 = sshll.u32 %s453, 4
          %s477 = int_to_ptr.vmem [resolvable:$true] %s476
          %s478 = sshll.u32 %s474, 4
          %s479 = int_to_ptr.hbm [resolvable:$true] %s478
          %481 = dma.vmem_to_hbm [thread:$0]  %s477, 128, %s479, %s450
        $region56: #{fnet_block.1} parent=43 // pred_fallthru
          _
      $region44: #{fnet_block.1} parent=5 // pred_fallthru
        _
      %p482 = scmp.le.s32.totalorder 2, %s21
      // Predicated region
      $region57: #{fnet_block.1} parent=5 // pred_check
        %p483 = pneg %p482
      $region58: #{fnet_block.1} parent=5 // pred_check_branch
        %485 = sbr.rel (%p483) target = $region60
      $region59: #{fnet_block.1} parent=5 // pred_region
        %s486 = ssub.s32 %s21, 2
        // Predicated region
        $region61: #{fnet_block.1} parent=59 // pred_check
          %p487 = pneg %p181
        $region62: #{fnet_block.1} parent=59 // pred_check_branch
          %489 = sbr.rel (%p487) target = $region64
        $region63: #{fnet_block.1} parent=59 // pred_region
          %s490 = sand.u32 %s166, 1
          %s491 = scalar_lea.sflag [#allocation4], %s490
          %s492 = sand.u32 %s166, 1
          %s493 = smul.addr %s492, 8
          %s494 = scalar_lea.vmem [#allocation5], %s493
          %496 = dma.done %s491, 128
        $region64: #{fnet_block.1} parent=59 // pred_fallthru
          _
        // Predicated region
        $region65: #{fnet_block.1} parent=59 // pred_check
          %p497 = pneg %p207
        $region66: #{fnet_block.1} parent=59 // pred_check_branch
          %499 = sbr.rel (%p497) target = $region68
        $region67: #{fnet_block.1} parent=59 // pred_region
          %s500 = sand.u32 %s192, 1
          %s501 = scalar_lea.sflag [#allocation7], %s500
          %s502 = sand.u32 %s192, 1
          %s503 = smul.addr %s502, 8
          %s504 = scalar_lea.vmem [#allocation6], %s503
          %506 = dma.done %s501, 128
        $region68: #{fnet_block.1} parent=59 // pred_fallthru
          _
      $region60: #{fnet_block.1} parent=5 // pred_fallthru
        _
    $region6: #{fnet_block.1} parent=1 // loop_footer
      %s25 = sadd.s32 1, %s21
    $region7: #{fnet_block.1} parent=1 // loop_footer_branch
      %20 = sbr.rel target = $region3
    $region8: #{fnet_block.1} parent=1 // loop_exit
      _
    %507 = vsyncpa [#allocation3], 1
    %s508 = scalar_lea.sflag [#allocation3], 1
    %509 = vsyncpa %s508, 1
    %510 = vsyncpa [#allocation4], 1
    %s511 = scalar_lea.sflag [#allocation4], 1
    %512 = vsyncpa %s511, 1
    %513 = vsyncpa [#allocation7], 1
    %s514 = scalar_lea.sflag [#allocation7], 1
    %515 = vsyncpa %s514, 1

</llo_original>
